<compile_context>
chip_gen: v7x
topology: tpu7x:2x2x1
jax: 0.10.0
libtpu: 0.0.40
codegen_flags: <defaults>
</compile_context>

<pallas_src>
import functools

import jax
import jax.numpy as jnp
from jax import lax
from jax.experimental import pallas as pl
from jax.experimental.pallas import tpu as pltpu


def _round_up(x, m):
    return (x + m - 1) // m * m


def crossnet_kernel(beta_ref, x_ref, w_ref, bsum_ref, o_ref, *, layer_num):
    # beta_ref: (L,)  f32, SMEM      -- beta_i = <B_i, w_i> (exclusive bias prefix)
    # x_ref:    (TB, Dp) storage dt  -- batch tile of x_0
    # w_ref:    (L, Dp)  storage dt  -- resident across the whole grid
    # bsum_ref: (1, Dp)  f32         -- B_L = sum_i bias_i, resident
    # o_ref:    (TB, Dp) storage dt

    # One NT MXU matmul covers every layer's per-row dot: P[:, i] = <x0_row, w_i>.
    p = lax.dot_general(
        x_ref[...], w_ref[...],
        dimension_numbers=(((1,), (1,)), ((), ())),
        preferred_element_type=jnp.float32,
    )                                                        # (TB, L) f32

    tb = x_ref.shape[0]
    c = jnp.ones((tb, 1), dtype=jnp.float32)                 # per-row coefficient
    # layer_num is small (2-6): static unroll, O(TB) scalar-vector work per layer.
    for i in range(layer_num):
        c = c * (1.0 + p[:, i:i + 1]) + beta_ref[i]

    # Single FMA over the tile; x is re-read here so no f32 copy of it stays
    # live across the recurrence (lower VMEM/vreg pressure -> bigger tiles).
    x0 = x_ref[...].astype(jnp.float32)
    o_ref[...] = (c * x0 + bsum_ref[...]).astype(o_ref.dtype)


def _pick_block_b(B, Dp, itemsize):
    """Largest batch tile that fits a generation-aware VMEM budget."""
    try:  # v5e/v6e: 128 MiB, v7x: 64 MiB per TensorCore
        vmem_cap = int(pltpu.get_tpu_info().vmem_capacity_bytes)
    except Exception:
        vmem_cap = 64 * 1024 * 1024          # conservative (v7x) fallback
    vmem_limit = max(32 << 20, min((vmem_cap * 3) // 4, 96 << 20))

    # Working set per row: 2x in + 2x out (double-buffered, storage dtype)
    # plus ~2 f32 temps; keep it under half the scoped limit, tile <= ~8 MiB.
    bytes_per_row = Dp * (4 * itemsize + 2 * 4)
    block_b = (vmem_limit // 2) // max(bytes_per_row, 1)
    block_b = min(block_b, (8 << 20) // (Dp * 4))

    # Prefer >= 2 grid steps when the batch allows it (keeps both v7x TCs busy;
    # harmless on single-TC v5e/v6e).
    if B >= 16:
        block_b = min(block_b, _round_up(pl.cdiv(B, 2), 8))

    if block_b >= B:
        return B, vmem_limit                  # single full-extent block
    return max(8, (block_b // 8) * 8), vmem_limit


def crossnet(x, kernels, bias, *, block_b=None):
    """x: (B, D); kernels, bias: (L, D)  ->  (B, D)."""
    B, D = x.shape
    L = kernels.shape[0]

    # ---- Batch-independent bias math hoisted out of the kernel (f32). ----
    k32 = kernels.astype(jnp.float32)
    b32 = bias.astype(jnp.float32)
    b_excl = jnp.cumsum(b32, axis=0) - b32                 # exclusive prefix B_i
    beta = jnp.sum(b_excl * k32, axis=1)                   # (L,) f32
    b_sum = jnp.sum(b32, axis=0, keepdims=True)            # (1, D) f32 = B_L

    # ---- Feature dim: pad only when it is not lane-aligned. ----
    if D % 128 == 0:
        Dp, x_in, w_in, bsum_in = D, x, kernels, b_sum
    else:
        Dp = _round_up(D, 128)
        x_in = jnp.zeros((B, Dp), x.dtype).at[:, :D].set(x)
        w_in = jnp.zeros((L, Dp), kernels.dtype).at[:, :D].set(kernels)
        bsum_in = jnp.zeros((1, Dp), jnp.float32).at[:, :D].set(b_sum)

    # ---- Batch tiling: never pad B; Pallas masks the partial last block. ----
    auto_block_b, vmem_limit = _pick_block_b(B, Dp, x.dtype.itemsize)
    if block_b is None:
        block_b = auto_block_b
    block_b = B if block_b >= B else max(8, (block_b // 8) * 8)
    grid_b = pl.cdiv(B, block_b)

    kern = functools.partial(crossnet_kernel, layer_num=L)
    out = pl.pallas_call(
        kern,
        out_shape=jax.ShapeDtypeStruct((B, Dp), x.dtype),
        grid=(grid_b,),
        in_specs=[
            pl.BlockSpec(memory_space=pltpu.MemorySpace.SMEM),   # beta (L,)
            pl.BlockSpec((block_b, Dp), lambda i: (i, 0)),       # x tile
            pl.BlockSpec((L, Dp), lambda i: (0, 0)),             # W, resident
            pl.BlockSpec((1, Dp), lambda i: (0, 0)),             # B_L, resident
        ],
        out_specs=pl.BlockSpec((block_b, Dp), lambda i: (i, 0)),
        compiler_params=pltpu.CompilerParams(
            dimension_semantics=("parallel",),                   # megacore on v7x
            vmem_limit_bytes=int(vmem_limit),
        ),
    )(beta, x_in, w_in, bsum_in)

    return out if Dp == D else out[:, :D]


def crossnet_reference(x, kernels, bias):
    """Pure-JAX reference mirroring the PyTorch forward exactly."""
    x0 = x[:, :, None]                                                   # (B, D, 1)
    xl = x0
    for i in range(kernels.shape[0]):
        xl_w = jnp.tensordot(xl, kernels[i][:, None], axes=[[1], [0]])   # (B, 1, 1)
        dot_ = jnp.matmul(x0, xl_w)                                      # (B, D, 1)
        xl = dot_ + bias[i][:, None] + xl
    return jnp.squeeze(xl, axis=2)


if __name__ == "__main__":
    keys = jax.random.split(jax.random.PRNGKey(0), 9)

    def run_case(kx, kw, kb, B, D, L, bias_scale, block_b=None, atol=1e-4, rtol=1e-4):
        x = jax.random.normal(kx, (B, D), dtype=jnp.float32)
        std = jnp.sqrt(2.0 / (D + 1)).astype(jnp.float32)
        kernels = jax.random.normal(kw, (L, D), dtype=jnp.float32) * std
        bias = jax.random.normal(kb, (L, D), dtype=jnp.float32) * bias_scale
        out = jax.block_until_ready(crossnet(x, kernels, bias, block_b=block_b))
        ref = crossnet_reference(x, kernels, bias)
        assert out.shape == (B, D)
        assert jnp.allclose(out, ref, atol=atol, rtol=rtol), (
            f"mismatch vs reference (B={B}, D={D}, L={L})")

    # 1) Small module-default shapes, zero bias, single full-batch block.
    run_case(keys[0], keys[1], keys[2], B=8, D=32, L=2, bias_scale=0.0)

    # 2) Unaligned D (padded path), partial last batch block, nonzero bias.
    run_case(keys[3], keys[4], keys[5], B=40, D=96, L=3, bias_scale=0.1, block_b=16)

    # 3) Lane-aligned D (no pad / no slice), larger B, L=6, nonzero bias --
    #    bounds the closed-form reassociation error at realistic depth.
    run_case(keys[6], keys[7], keys[8], B=300, D=256, L=6, bias_scale=0.1,
             atol=2e-3, rtol=2e-3)

    print("KERNEL_OK")
</pallas_src>

<mosaic_0001>
module attributes {stable_mosaic.version = 11 : i64} {
  func.func @crossnet_kernel(%arg0: i32, %arg1: memref<2xf32, #tpu.memory_space<smem>>, %arg2: memref<8x128xf32, #tpu.memory_space<vmem>>, %arg3: memref<2x128xf32, #tpu.memory_space<vmem>>, %arg4: memref<1x128xf32, #tpu.memory_space<vmem>>, %arg5: memref<8x128xf32, #tpu.memory_space<vmem>>) attributes {dimension_semantics = [#tpu.dimension_semantics<parallel>], iteration_bounds = array<i64: 1>, scalar_prefetch = 0 : i64, scratch_operands = 0 : i64, tpu.core_type = #tpu.core_type<tc>, window_params = [{transform_indices = @transform_0, window_bounds = array<i64: 2>}, {transform_indices = @transform_1, window_bounds = array<i64: 8, 128>}, {pipeline_mode = #tpu.pipeline_mode<synchronous>, transform_indices = @transform_2, window_bounds = array<i64: 2, 128>}, {pipeline_mode = #tpu.pipeline_mode<synchronous>, transform_indices = @transform_3, window_bounds = array<i64: 1, 128>}, {transform_indices = @transform_4, window_bounds = array<i64: 8, 128>}]} {
    %c0 = arith.constant 0 : index
    %c0_0 = arith.constant 0 : index
    %0 = vector.load %arg2[%c0, %c0_0] : memref<8x128xf32, #tpu.memory_space<vmem>>, vector<8x128xf32>
    %c0_1 = arith.constant 0 : index
    %c0_2 = arith.constant 0 : index
    %1 = vector.load %arg3[%c0_1, %c0_2] : memref<2x128xf32, #tpu.memory_space<vmem>>, vector<2x128xf32>
    %cst = arith.constant dense<0.000000e+00> : vector<8x2xf32>
    %2 = tpu.matmul %0, %1, %cst {dimension_numbers = #tpu.dot_dimension_numbers<[1], [1], [0], [0], [0, 0, 1, 0], [], []>} : vector<8x128xf32>, vector<2x128xf32>, vector<8x2xf32> -> vector<8x2xf32>
    %cst_3 = arith.constant 1.000000e+00 : f32
    %3 = vector.broadcast %cst_3 : f32 to vector<8x1xf32>
    %4 = vector.extract_strided_slice %2 {offsets = [0, 0], sizes = [8, 1], strides = [1, 1]} : vector<8x2xf32> to vector<8x1xf32>
    %cst_4 = arith.constant 1.000000e+00 : f32
    %5 = vector.broadcast %cst_4 : f32 to vector<8x1xf32>
    %6 = arith.addf %5, %4 : vector<8x1xf32>
    %7 = arith.mulf %3, %6 : vector<8x1xf32>
    %c0_5 = arith.constant 0 : index
    %8 = memref.load %arg1[%c0_5] : memref<2xf32, #tpu.memory_space<smem>>
    %9 = vector.broadcast %8 : f32 to vector<8x1xf32>
    %10 = arith.addf %7, %9 : vector<8x1xf32>
    %11 = vector.extract_strided_slice %2 {offsets = [0, 1], sizes = [8, 1], strides = [1, 1]} : vector<8x2xf32> to vector<8x1xf32>
    %cst_6 = arith.constant 1.000000e+00 : f32
    %12 = vector.broadcast %cst_6 : f32 to vector<8x1xf32>
    %13 = arith.addf %12, %11 : vector<8x1xf32>
    %14 = arith.mulf %10, %13 : vector<8x1xf32>
    %c1 = arith.constant 1 : index
    %15 = memref.load %arg1[%c1] : memref<2xf32, #tpu.memory_space<smem>>
    %16 = vector.broadcast %15 : f32 to vector<8x1xf32>
    %17 = arith.addf %14, %16 : vector<8x1xf32>
    %c0_7 = arith.constant 0 : index
    %c0_8 = arith.constant 0 : index
    %18 = vector.load %arg2[%c0_7, %c0_8] : memref<8x128xf32, #tpu.memory_space<vmem>>, vector<8x128xf32>
    %19 = vector.broadcast %17 : vector<8x1xf32> to vector<8x128xf32>
    %20 = arith.mulf %19, %18 : vector<8x128xf32>
    %c0_9 = arith.constant 0 : index
    %c0_10 = arith.constant 0 : index
    %21 = vector.load %arg4[%c0_9, %c0_10] : memref<1x128xf32, #tpu.memory_space<vmem>>, vector<1x128xf32>
    %22 = vector.broadcast %21 : vector<1x128xf32> to vector<8x128xf32>
    %23 = arith.addf %20, %22 : vector<8x128xf32>
    %c0_11 = arith.constant 0 : index
    %c0_12 = arith.constant 0 : index
    %24 = vector.load %arg5[%c0_11, %c0_12] : memref<8x128xf32, #tpu.memory_space<vmem>>, vector<8x128xf32>
    tpu.vector_store %arg5[%c0_11, %c0_12], %23 {strides = array<i32>} : memref<8x128xf32, #tpu.memory_space<vmem>>, vector<8x128xf32>,
    return
  }
  func.func @transform_0(%arg0: i32) -> i32 {
    %c0_i32 = arith.constant 0 : i32
    %c0_i32_0 = arith.constant 0 : i32
    return %c0_i32 : i32
  }
  func.func @transform_1(%arg0: i32) -> (i32, i32) {
    %c0_i32 = arith.constant 0 : i32
    %c0_i32_0 = arith.constant 0 : i32
    return %arg0, %c0_i32 : i32, i32
  }
  func.func @transform_2(%arg0: i32) -> (i32, i32) {
    %c0_i32 = arith.constant 0 : i32
    %c0_i32_0 = arith.constant 0 : i32
    %c0_i32_1 = arith.constant 0 : i32
    return %c0_i32, %c0_i32_0 : i32, i32
  }
  func.func @transform_3(%arg0: i32) -> (i32, i32) {
    %c0_i32 = arith.constant 0 : i32
    %c0_i32_0 = arith.constant 0 : i32
    %c0_i32_1 = arith.constant 0 : i32
    return %c0_i32, %c0_i32_0 : i32, i32
  }
  func.func @transform_4(%arg0: i32) -> (i32, i32) {
    %c0_i32 = arith.constant 0 : i32
    %c0_i32_0 = arith.constant 0 : i32
    return %arg0, %c0_i32 : i32, i32
  }
}

</mosaic_0001>

<llo_original>
// kernel: tpu_custom_call.1
$region0: #{tpu_custom_call.1}
  #allocation0 [shape = 'u32[]', space=smem, size = 0x4, offset = 0x4, fixed_abs, tag = 'smem constant byte address 0x4 - core index']
  #allocation1 [shape = 'u32[144,128]{1,0:T(1,128)}', space=vmem, size = 0x12000, scoped, tag = 'internal scratch']
  %s0 = inlined_call_operand.hbm [shape: f32[2], index: 0, kind: input, shape index: {}]
  %s1 = inlined_call_operand.hbm [shape: f32[8,128], index: 1, kind: input, shape index: {}]
  %s2 = inlined_call_operand.vmem [shape: f32[2,128], index: 2, kind: input, shape index: {}]
  %s3 = inlined_call_operand.vmem [shape: f32[1,128], index: 3, kind: input, shape index: {}]
  %s4 = inlined_call_operand.hbm [shape: f32[8,128], index: 4, kind: output, shape index: {}]
  %s5 = sld [smem:[#allocation0]]
  $region34: #{tpu_custom_call.1} parent=0
    _
  %s7 = ssub.s32 1, %s5
  %s8 = scalar_select 0, %s7, %s5
  $region1: #{tpu_custom_call.1} parent=0
    #allocation2 [shape = 'u8[512]{0}', space=smem, size = 0x200, scoped, tag = 'input window, operand 0, single buffered']
    #allocation3 [shape = 's32[1]{0}', space=sflag, size = 0x4, scoped, tag = 'scoped memory for tpu_custom_call.1']
    #allocation4 [shape = 's32[1]{0}', space=sflag, size = 0x4, scoped, tag = 'scoped memory for tpu_custom_call.1']
    #allocation5 [shape = 's32[1]{0}', space=sflag, size = 0x4, scoped, tag = 'scoped memory for tpu_custom_call.1']
    #allocation6 [shape = 'u8[4096]{0}', space=vmem, size = 0x1000, scoped, tag = 'input window, operand 1, single buffered']
    #allocation7 [shape = 'u8[4096]{0}', space=vmem, size = 0x1000, scoped, tag = 'output window, operand 0, single buffered']
    %9 = vsyncpa [#allocation5], 0
    %10 = vsyncpa [#allocation3], 0
    %11 = vsyncpa [#allocation4], 0
    // Predicated region
    $region2: #{tpu_custom_call.1} parent=1 // pred_check
      _
    $region3: #{tpu_custom_call.1} parent=1 // pred_check_branch
      %13 = sbr.rel (0) target = $region5
    $region4: #{tpu_custom_call.1} parent=1 // pred_region
      %s15 = ssub.s32 16, 16
      %16 = vsyncadd [#allocation5], %s15
      %19 = dma.hbm_to_smem %s0, 16, [#allocation2], [#allocation5]
    $region5: #{tpu_custom_call.1} parent=1 // pred_fallthru
      _
    // Predicated region
    $region6: #{tpu_custom_call.1} parent=1 // pred_check
      _
    $region7: #{tpu_custom_call.1} parent=1 // pred_check_branch
      %21 = sbr.rel (0) target = $region9
    $region8: #{tpu_custom_call.1} parent=1 // pred_region
      %s23 = ssub.s32 128, 128
      %24 = vsyncadd [#allocation3], %s23
      %s26 = sshll.u32 [#allocation6], 4
      %s27 = int_to_ptr.vmem [resolvable:$true] %s26
      %29 = dma.hbm_to_vmem [thread:$0]  %s1, 128, %s27, [#allocation3]
    $region9: #{tpu_custom_call.1} parent=1 // pred_fallthru
      _
    // Predicated region
    $region10: #{tpu_custom_call.1} parent=1 // pred_check
      _
    $region11: #{tpu_custom_call.1} parent=1 // pred_check_branch
      %31 = sbr.rel (0) target = $region13
    $region12: #{tpu_custom_call.1} parent=1 // pred_region
      _
    $region13: #{tpu_custom_call.1} parent=1 // pred_fallthru
      _
    // Predicated region
    $region14: #{tpu_custom_call.1} parent=1 // pred_check
      _
    $region15: #{tpu_custom_call.1} parent=1 // pred_check_branch
      %33 = sbr.rel (0) target = $region17
    $region16: #{tpu_custom_call.1} parent=1 // pred_region
      _
    $region17: #{tpu_custom_call.1} parent=1 // pred_fallthru
      _
    // Predicated region
    $region18: #{tpu_custom_call.1} parent=1 // pred_check
      _
    $region19: #{tpu_custom_call.1} parent=1 // pred_check_branch
      %35 = sbr.rel (0) target = $region21
    $region20: #{tpu_custom_call.1} parent=1 // pred_region
      %36 = dma.done [#allocation5], 16
    $region21: #{tpu_custom_call.1} parent=1 // pred_fallthru
      _
    // Predicated region
    $region22: #{tpu_custom_call.1} parent=1 // pred_check
      _
    $region23: #{tpu_custom_call.1} parent=1 // pred_check_branch
      %38 = sbr.rel (0) target = $region25
    $region24: #{tpu_custom_call.1} parent=1 // pred_region
      %39 = dma.done [#allocation3], 128
    $region25: #{tpu_custom_call.1} parent=1 // pred_fallthru
      _
    %40 = sfence
    %v41 = vld [vmem:[#allocation6] sm:$0xff]
    %v42 = vld [vmem:[%s2] sm:$0x3]
    %43 = vmatprep.subr.mxu0 0.0
    %44 = vmatpush1.xpose.msra.mxu0 %v42
    %45 = vmatprep.subr.mxu0 0.0
    %46 = vmatpush1.xpose.msra.mxu0 0.0
    %47 = vmatprep.subr.mxu0 0.0
    %48 = vmatpush1.xpose.msra.mxu0 0.0
    %49 = vmatprep.subr.mxu0 0.0
    %50 = vmatpush1.xpose.msra.mxu0 0.0
    %51 = vmatprep.subr.mxu0 0.0
    %52 = vmatpush1.xpose.msra.mxu0 0.0
    %53 = vmatprep.subr.mxu0 0.0
    %54 = vmatpush1.xpose.msra.mxu0 0.0
    %55 = vmatprep.subr.mxu0 0.0
    %56 = vmatpush1.xpose.msra.mxu0 0.0
    %57 = vmatprep.subr.mxu0 0.0
    %58 = vmatpush1.xpose.msra.mxu0 0.0
    %59 = vmatprep.subr.mxu0 0.0
    %60 = vmatpush1.xpose.msra.mxu0 0.0
    %61 = vmatprep.subr.mxu0 0.0
    %62 = vmatpush1.xpose.msra.mxu0 0.0
    %63 = vmatprep.subr.mxu0 0.0
    %64 = vmatpush1.xpose.msra.mxu0 0.0
    %65 = vmatprep.subr.mxu0 0.0
    %66 = vmatpush1.xpose.msra.mxu0 0.0
    %67 = vmatprep.subr.mxu0 0.0
    %68 = vmatpush1.xpose.msra.mxu0 0.0
    %69 = vmatprep.subr.mxu0 0.0
    %70 = vmatpush1.xpose.msra.mxu0 0.0
    %71 = vmatprep.subr.mxu0 0.0
    %72 = vmatpush1.xpose.msra.mxu0 0.0
    %73 = vmatprep.subr.mxu0 0.0
    %74 = vmatpush1.xpose.msra.mxu0 0.0
    %75 = vmatprep.subr.mxu0 0.0
    %76 = vmatpush1.xpose.msra.mxu0 0.0
    %77 = vmatprep.subr.mxu0 0.0
    %78 = vmatpush1.xpose.msra.mxu0 0.0
    %79 = vmatprep.subr.mxu0 0.0
    %80 = vmatpush1.xpose.msra.mxu0 0.0
    %81 = vmatprep.subr.mxu0 0.0
    %82 = vmatpush1.xpose.msra.mxu0 0.0
    %83 = vmatprep.subr.mxu0 0.0
    %84 = vmatpush1.xpose.msra.mxu0 0.0
    %85 = vmatprep.subr.mxu0 0.0
    %86 = vmatpush1.xpose.msra.mxu0 0.0
    %87 = vmatprep.subr.mxu0 0.0
    %88 = vmatpush1.xpose.msra.mxu0 0.0
    %89 = vmatprep.subr.mxu0 0.0
    %90 = vmatpush1.xpose.msra.mxu0 0.0
    %91 = vmatprep.subr.mxu0 0.0
    %92 = vmatpush1.xpose.msra.mxu0 0.0
    %93 = vmatprep.subr.mxu0 0.0
    %94 = vmatpush1.xpose.msra.mxu0 0.0
    %95 = vmatprep.subr.mxu0 0.0
    %96 = vmatpush1.xpose.msra.mxu0 0.0
    %97 = vmatprep.subr.mxu0 0.0
    %98 = vmatpush1.xpose.msra.mxu0 0.0
    %99 = vmatprep.subr.mxu0 0.0
    %100 = vmatpush1.xpose.msra.mxu0 0.0
    %101 = vmatprep.subr.mxu0 0.0
    %102 = vmatpush1.xpose.msra.mxu0 0.0
    %103 = vmatprep.subr.mxu0 0.0
    %104 = vmatpush1.xpose.msra.mxu0 0.0
    %105 = vmatprep.subr.mxu0 0.0
    %106 = vmatpush1.xpose.msra.mxu0 0.0
    %107 = vmatprep.mubr.f32.mxu0 0.0
    %108 = vmatmul.mubr.f32.gmra.mrb[0].mxu0 %v41
    %v109 = vpop.f32.mrb[0].mxu0
    %v110 = vadd.f32 0.0, %v109
    %v111 = vpop.f32.mrb[0].mxu0
    %112 = vdwg.mxu0
    %v113 = vadd.f32 %v110, 1.0
    %s114 = sld [smem:[#allocation2]]
    %v115 = vstv %s114
    %v116 = vadd.f32 %v113, %v115
    %118 = vrot.lane.b32.xlu0 %v113, 127
    %v119 = vpop.permute.xlu0 %118
    %v121 = vmul.f32 %v116, %v119
    %s122 = sld [smem:[#allocation2 + $0x1]]
    %v123 = vstv %s122
    %v124 = vadd.f32 %v121, %v123
    %126 = vset.pattern.permute.xlu0 0
    %127 = vperm.xlu0 %126, %v124
    %v128 = vpop.permute.xlu0 %127
    %v130 = vmul.f32 %v128, %v41
    %v131 = vld [vmem:[%s3] sm:$0x1]
    %v133 = vlaneseq
    %v134 = vshrl.u32 %v133, 7
    %v135 = vsub.s32 0, %v134
    %v136 = vrot.slane %v131, %v135
    %v138 = vadd.f32 %v130, %v136
    %139 = vst [vmem:[#allocation7] sm:$0xff] %v138
    // Predicated region
    $region26: #{tpu_custom_call.1} parent=1 // pred_check
      _
    $region27: #{tpu_custom_call.1} parent=1 // pred_check_branch
      %141 = sbr.rel (0) target = $region29
    $region28: #{tpu_custom_call.1} parent=1 // pred_region
      %s143 = ssub.s32 128, 128
      %144 = vsyncadd [#allocation4], %s143
      %s146 = sshll.u32 [#allocation7], 4
      %s147 = int_to_ptr.vmem [resolvable:$true] %s146
      %149 = dma.vmem_to_hbm [thread:$0]  %s147, 128, %s4, [#allocation4]
    $region29: #{tpu_custom_call.1} parent=1 // pred_fallthru
      _
    // Predicated region
    $region30: #{tpu_custom_call.1} parent=1 // pred_check
      _
    $region31: #{tpu_custom_call.1} parent=1 // pred_check_branch
      %151 = sbr.rel (0) target = $region33
    $region32: #{tpu_custom_call.1} parent=1 // pred_region
      %152 = dma.done [#allocation4], 128
    $region33: #{tpu_custom_call.1} parent=1 // pred_fallthru
      _
    %153 = vsyncpa [#allocation3], 1
    %154 = vsyncpa [#allocation4], 1
    %155 = vsyncpa [#allocation5], 1

</llo_original>
